<compile_context>
chip_gen: v6e
topology: v6e:2x2x1
jax: 0.10.0
libtpu: 0.0.40
codegen_flags: <defaults>
</compile_context>

<pallas_src>
import jax
import jax.numpy as jnp
from jax.experimental import pallas as pl
from jax.experimental.pallas import tpu as pltpu


def _round_up(x, m):
    return (x + m - 1) // m * m


def _vmem_capacity_bytes():
    """Physical VMEM per TensorCore (v5e/v6e 128 MiB, v7x 64 MiB); safe fallback."""
    try:
        cap = int(pltpu.get_tpu_info().vmem_capacity_bytes)
        if cap > 0:
            return cap
    except Exception:
        pass
    return 64 << 20  # conservative (v7x per-TC)


def _single_pass_kernel(x_ref, w_ref, b_ref, o_ref):
    # x_ref: (TB, C, HW) — whole spatial extent in one tile; no accumulator needed.
    pooled = jnp.sum(x_ref[...].astype(jnp.float32), axis=-1)          # (TB, C)
    # Dropout(0.5) in eval mode == identity.
    o_ref[...] = (jnp.dot(pooled, w_ref[...],
                          preferred_element_type=jnp.float32)
                  + b_ref[...])


def _make_multi_step_kernel(thw, hw, need_mask):
    n_slabs = thw // 128

    def kernel(x_ref, w_ref, b_ref, o_ref, acc_ref):
        # x_ref:   (TB, C, THW) activation dtype
        # w_ref:   (C, NCP) f32 (pre-scaled by 1/(H*W), lane-padded)
        # b_ref:   (1, NCP) f32
        # o_ref:   (TB, NCP) f32
        # acc_ref: (TB, C, 128) f32 lane-dense partial-sum scratch (P3 pattern)
        k = pl.program_id(1)

        @pl.when(k == 0)
        def _init():
            acc_ref[...] = jnp.zeros_like(acc_ref)

        if need_mask:
            valid = hw - k * thw   # lanes of this tile still inside [0, HW)

        # Slab-wise VPU adds into the lane-dense accumulator; the single XLU
        # cross-lane reduce is deferred to the finalize step.
        for j in range(n_slabs):
            slab = x_ref[:, :, j * 128:(j + 1) * 128].astype(jnp.float32)
            if need_mask:
                pos = jax.lax.broadcasted_iota(jnp.int32, slab.shape, 2) + j * 128
                slab = jnp.where(pos < valid, slab, 0.0)   # zero the overhang lanes
            acc_ref[...] += slab

        @pl.when(k == pl.num_programs(1) - 1)
        def _finalize():
            pooled = jnp.sum(acc_ref[...], axis=-1)                    # (TB, C)
            # Dropout(0.5) in eval mode == identity.
            o_ref[...] = (jnp.dot(pooled, w_ref[...],
                                  preferred_element_type=jnp.float32)
                          + b_ref[...])

    return kernel


def classification_head(x_nchw, weight_nc_c, bias_n, *,
                        force_thw=None, force_tb=None):
    """AdaptiveAvgPool2d(1) -> Dropout(eval) -> Linear.

    x_nchw:      (B, C, H, W), any float dtype (streamed in its native dtype)
    weight_nc_c: (num_classes, C) torch-layout nn.Linear weight
    bias_n:      (num_classes,)
    returns:     (B, num_classes) f32
    """
    B, C, H, W = x_nchw.shape
    NC = weight_nc_c.shape[0]
    HW = H * W
    x_bytes = jnp.dtype(x_nchw.dtype).itemsize
    ncp = _round_up(NC, 128)                     # lane-dense output store

    # ---- per-generation VMEM budget (leave ~20% headroom; never grab it all) ----
    vmem_phys = _vmem_capacity_bytes()
    vmem_budget = int(vmem_phys * 0.8)
    x_tile_budget = int(vmem_budget * 0.35)      # per x buffer (Pallas double-buffers)

    # ---- pick thw (reduction tile) first, then tb (batch tile) ----
    tb_ref = max(1, min(B, 8))
    if force_thw is not None:
        thw = int(force_thw)
    else:
        max_thw = x_tile_budget // max(1, tb_ref * C * x_bytes)
        thw = HW if max_thw >= HW else max(128, (max_thw // 128) * 128)

    if force_tb is not None:
        tb = int(force_tb)
    else:
        max_tb = x_tile_budget // max(1, C * thw * x_bytes)
        if B <= 8 or max_tb < 8:
            tb = B
        else:
            tb = min(int(max_tb), 128, B)
            if B >= 16:                          # >= 2 batch blocks: work for v7x's 2nd TC
                tb = min(tb, _round_up((B + 1) // 2, 8))
            tb = max(8, (tb // 8) * 8)           # output-block sublane legality
            if tb >= B:
                tb = B

    def _vmem_need(tb_, thw_):
        acc = tb_ * C * 128 * 4 if thw_ < HW else 0
        return (2 * tb_ * C * thw_ * x_bytes     # double-buffered x tiles
                + 2 * (C + 1) * ncp * 4          # weight + bias
                + 2 * tb_ * ncp * 4              # double-buffered output tile
                + acc                            # accumulator scratch
                + (2 << 20))                     # compiler internal scratch headroom

    if force_thw is None and force_tb is None:
        # Shrink tiles if over budget; never clamp the limit below the requirement.
        while _vmem_need(tb, thw) > vmem_budget:
            if thw > 128:
                thw = max(128, ((thw // 2) // 128) * 128)
            elif tb > 8 and B > 8:
                tb = max(8, ((tb // 2) // 8) * 8)
            else:
                break

    single_pass = thw >= HW
    if single_pass:
        thw = HW
    need_mask = (not single_pass) and (HW % thw != 0)

    vmem_need = _vmem_need(tb, thw)
    vmem_limit = int(min(max(vmem_need, 16 << 20), int(vmem_phys * 0.92)))

    # ---- operands: x is streamed unpadded (no extra HBM pass) ----
    x_flat = x_nchw.reshape(B, C, HW)            # metadata-only reshape
    # 1/(H*W) folded into the weight: in-kernel work is a plain sum, and the
    # in-kernel zero-masking of ragged tiles stays sum-safe.
    w_scaled = jnp.zeros((C, ncp), jnp.float32).at[:, :NC].set(
        weight_nc_c.astype(jnp.float32).T / jnp.float32(HW))
    bias_2d = jnp.zeros((1, ncp), jnp.float32).at[0, :NC].set(
        bias_n.astype(jnp.float32))

    if single_pass:
        grid = (pl.cdiv(B, tb),)
        in_specs = [
            pl.BlockSpec((tb, C, HW), lambda i: (i, 0, 0)),
            pl.BlockSpec((C, ncp), lambda i: (0, 0)),
            pl.BlockSpec((1, ncp), lambda i: (0, 0)),
        ]
        out_specs = pl.BlockSpec((tb, ncp), lambda i: (i, 0))
        scratch_shapes = []
        kernel = _single_pass_kernel
        dim_sem = ("parallel",)
    else:
        grid = (pl.cdiv(B, tb), pl.cdiv(HW, thw))
        in_specs = [
            pl.BlockSpec((tb, C, thw), lambda i, k: (i, 0, k)),
            pl.BlockSpec((C, ncp), lambda i, k: (0, 0)),
            pl.BlockSpec((1, ncp), lambda i, k: (0, 0)),
        ]
        out_specs = pl.BlockSpec((tb, ncp), lambda i, k: (i, 0))
        scratch_shapes = [pltpu.VMEM((tb, C, 128), jnp.float32)]
        kernel = _make_multi_step_kernel(thw, HW, need_mask)
        dim_sem = ("parallel", "arbitrary")

    out = pl.pallas_call(
        kernel,
        out_shape=jax.ShapeDtypeStruct((B, ncp), jnp.float32),
        grid_spec=pltpu.PrefetchScalarGridSpec(
            num_scalar_prefetch=0,
            grid=grid,
            in_specs=in_specs,
            out_specs=out_specs,
            scratch_shapes=scratch_shapes,
        ),
        compiler_params=pltpu.CompilerParams(
            dimension_semantics=dim_sem,
            vmem_limit_bytes=vmem_limit,
        ),
    )(x_flat, w_scaled, bias_2d)

    return out[:, :NC]


if __name__ == "__main__":
    key = jax.random.PRNGKey(0)

    # ---- Test 1: module-native shapes (single-pass path: whole HW fits one tile) ----
    B, C, H, W = 2, 32, 16, 16          # encoder_channels = 32
    NUM_CLASSES = 5
    kx, kw, kb = jax.random.split(key, 3)
    x = jax.random.normal(kx, (B, C, H, W), dtype=jnp.float32)
    # nn.Linear(encoder_channels, num_classes): weight (NC, C), bias (NC,)
    bound = 1.0 / (C ** 0.5)
    w_torch = jax.random.uniform(kw, (NUM_CLASSES, C), minval=-bound, maxval=bound)
    b_torch = jax.random.uniform(kb, (NUM_CLASSES,), minval=-bound, maxval=bound)

    out = classification_head(x, w_torch, b_torch)
    jax.block_until_ready(out)
    ref = jnp.mean(x, axis=(2, 3)) @ w_torch.T + b_torch   # eval: dropout is identity
    assert out.shape == (B, NUM_CLASSES)
    assert jnp.allclose(out, ref, atol=1e-4, rtol=1e-4)

    # ---- Test 2: tiled-reduction path with ragged HW (13x13=169) and ragged batch ----
    # No wrapper-side padding: overhang lanes are zero-masked in-kernel.
    B2, H2, W2 = 10, 13, 13
    x2 = jax.random.normal(jax.random.fold_in(key, 7), (B2, C, H2, W2),
                           dtype=jnp.float32)
    out2 = classification_head(x2, w_torch, b_torch, force_thw=128, force_tb=8)
    jax.block_until_ready(out2)
    ref2 = jnp.mean(x2, axis=(2, 3)) @ w_torch.T + b_torch
    assert out2.shape == (B2, NUM_CLASSES)
    assert jnp.allclose(out2, ref2, atol=1e-4, rtol=1e-4)

    print("KERNEL_OK")
</pallas_src>

<mosaic_0001>
module attributes {stable_mosaic.version = 11 : i64} {
  func.func @_single_pass_kernel(%arg0: i32, %arg1: memref<2x32x256xf32, #tpu.memory_space<vmem>>, %arg2: memref<32x128xf32, #tpu.memory_space<vmem>>, %arg3: memref<1x128xf32, #tpu.memory_space<vmem>>, %arg4: memref<2x128xf32, #tpu.memory_space<vmem>>) attributes {dimension_semantics = [#tpu.dimension_semantics<parallel>], iteration_bounds = array<i64: 1>, scalar_prefetch = 0 : i64, scratch_operands = 0 : i64, tpu.core_type = #tpu.core_type<tc>, window_params = [{transform_indices = @transform_0, window_bounds = array<i64: 2, 32, 256>}, {pipeline_mode = #tpu.pipeline_mode<synchronous>, transform_indices = @transform_1, window_bounds = array<i64: 32, 128>}, {pipeline_mode = #tpu.pipeline_mode<synchronous>, transform_indices = @transform_2, window_bounds = array<i64: 1, 128>}, {transform_indices = @transform_3, window_bounds = array<i64: 2, 128>}]} {
    %c0 = arith.constant 0 : index
    %c0_0 = arith.constant 0 : index
    %c0_1 = arith.constant 0 : index
    %0 = vector.load %arg1[%c0, %c0_0, %c0_1] : memref<2x32x256xf32, #tpu.memory_space<vmem>>, vector<2x32x256xf32>
    %cst = arith.constant dense<0.000000e+00> : vector<2x32xf32>
    %1 = vector.multi_reduction <add>, %0, %cst [2] : vector<2x32x256xf32> to vector<2x32xf32>
    %c0_2 = arith.constant 0 : index
    %c0_3 = arith.constant 0 : index
    %2 = vector.load %arg2[%c0_2, %c0_3] : memref<32x128xf32, #tpu.memory_space<vmem>>, vector<32x128xf32>
    %cst_4 = arith.constant dense<0.000000e+00> : vector<2x128xf32>
    %3 = tpu.matmul %1, %2, %cst_4 {dimension_numbers = #tpu.dot_dimension_numbers<[1], [0], [0], [1], [0, 0, 1, 1], [], []>} : vector<2x32xf32>, vector<32x128xf32>, vector<2x128xf32> -> vector<2x128xf32>
    %c0_5 = arith.constant 0 : index
    %c0_6 = arith.constant 0 : index
    %4 = vector.load %arg3[%c0_5, %c0_6] : memref<1x128xf32, #tpu.memory_space<vmem>>, vector<1x128xf32>
    %5 = vector.broadcast %4 : vector<1x128xf32> to vector<2x128xf32>
    %6 = arith.addf %3, %5 : vector<2x128xf32>
    %c0_7 = arith.constant 0 : index
    %c0_8 = arith.constant 0 : index
    %7 = vector.load %arg4[%c0_7, %c0_8] : memref<2x128xf32, #tpu.memory_space<vmem>>, vector<2x128xf32>
    tpu.vector_store %arg4[%c0_7, %c0_8], %6 {strides = array<i32>} : memref<2x128xf32, #tpu.memory_space<vmem>>, vector<2x128xf32>,
    return
  }
  func.func @transform_0(%arg0: i32) -> (i32, i32, i32) {
    %c0_i32 = arith.constant 0 : i32
    %c0_i32_0 = arith.constant 0 : i32
    %c0_i32_1 = arith.constant 0 : i32
    return %arg0, %c0_i32, %c0_i32_0 : i32, i32, i32
  }
  func.func @transform_1(%arg0: i32) -> (i32, i32) {
    %c0_i32 = arith.constant 0 : i32
    %c0_i32_0 = arith.constant 0 : i32
    %c0_i32_1 = arith.constant 0 : i32
    return %c0_i32, %c0_i32_0 : i32, i32
  }
  func.func @transform_2(%arg0: i32) -> (i32, i32) {
    %c0_i32 = arith.constant 0 : i32
    %c0_i32_0 = arith.constant 0 : i32
    %c0_i32_1 = arith.constant 0 : i32
    return %c0_i32, %c0_i32_0 : i32, i32
  }
  func.func @transform_3(%arg0: i32) -> (i32, i32) {
    %c0_i32 = arith.constant 0 : i32
    %c0_i32_0 = arith.constant 0 : i32
    return %arg0, %c0_i32 : i32, i32
  }
}

</mosaic_0001>

<llo_original>
// kernel: tpu_custom_call.1
$region0: #{tpu_custom_call.1}
  #allocation0 [shape = 'u32[]', space=smem, size = 0x4, offset = 0x4, fixed_abs, tag = 'smem constant byte address 0x4 - core index']
  #allocation1 [shape = 'u32[144,128]{1,0:T(1,128)}', space=vmem, size = 0x12000, scoped, tag = 'internal scratch']
  %s0 = inlined_call_operand.hbm [shape: f32[2,32,256], index: 0, kind: input, shape index: {}]
  %s1 = inlined_call_operand.hbm [shape: f32[32,128], index: 1, kind: input, shape index: {}]
  %s2 = inlined_call_operand.vmem [shape: f32[1,128], index: 2, kind: input, shape index: {}]
  %s3 = inlined_call_operand.hbm [shape: f32[2,128], index: 3, kind: output, shape index: {}]
  %s4 = sld [smem:[#allocation0]]
  $region30: #{tpu_custom_call.1} parent=0
    _
  %s6 = ssub.s32 1, %s4
  %s7 = scalar_select 0, %s6, %s4
  $region1: #{tpu_custom_call.1} parent=0
    #allocation2 [shape = 'u8[65536]{0}', space=vmem, size = 0x10000, scoped, tag = 'input window, operand 0, single buffered']
    #allocation3 [shape = 's32[1]{0}', space=sflag, size = 0x4, scoped, tag = 'scoped memory for tpu_custom_call.1']
    #allocation4 [shape = 's32[1]{0}', space=sflag, size = 0x4, scoped, tag = 'scoped memory for tpu_custom_call.1']
    #allocation5 [shape = 'u8[16384]{0}', space=vmem, size = 0x4000, scoped, tag = 'input window, operand 1, single buffered']
    #allocation6 [shape = 's32[1]{0}', space=sflag, size = 0x4, scoped, tag = 'scoped memory for tpu_custom_call.1']
    #allocation7 [shape = 'u8[1024]{0}', space=vmem, size = 0x400, scoped, tag = 'output window, operand 0, single buffered']
    %8 = vsyncpa [#allocation3], 0
    %9 = vsyncpa [#allocation6], 0
    %10 = vsyncpa [#allocation4], 0
    // Predicated region
    $region2: #{tpu_custom_call.1} parent=1 // pred_check
      _
    $region3: #{tpu_custom_call.1} parent=1 // pred_check_branch
      %12 = sbr.rel (0) target = $region5
    $region4: #{tpu_custom_call.1} parent=1 // pred_region
      %s14 = ssub.s32 2048, 2048
      %15 = vsyncadd [#allocation3], %s14
      %s16 = sshll.u32 [#allocation2], 4
      %s17 = int_to_ptr.vmem [resolvable:$true] %s16
      %22 = dma.hbm_to_vmem [thread:$0]  %s0, 2048, %s17, [#allocation3], 256, 256, 16
    $region5: #{tpu_custom_call.1} parent=1 // pred_fallthru
      _
    // Predicated region
    $region6: #{tpu_custom_call.1} parent=1 // pred_check
      _
    $region7: #{tpu_custom_call.1} parent=1 // pred_check_branch
      %24 = sbr.rel (0) target = $region9
    $region8: #{tpu_custom_call.1} parent=1 // pred_region
      %s26 = ssub.s32 512, 512
      %27 = vsyncadd [#allocation6], %s26
      %s28 = sshll.u32 [#allocation5], 4
      %s29 = int_to_ptr.vmem [resolvable:$true] %s28
      %34 = dma.hbm_to_vmem [thread:$0]  %s1, 512, %s29, [#allocation6], 128, 128, 8
    $region9: #{tpu_custom_call.1} parent=1 // pred_fallthru
      _
    // Predicated region
    $region10: #{tpu_custom_call.1} parent=1 // pred_check
      _
    $region11: #{tpu_custom_call.1} parent=1 // pred_check_branch
      %36 = sbr.rel (0) target = $region13
    $region12: #{tpu_custom_call.1} parent=1 // pred_region
      _
    $region13: #{tpu_custom_call.1} parent=1 // pred_fallthru
      _
    // Predicated region
    $region14: #{tpu_custom_call.1} parent=1 // pred_check
      _
    $region15: #{tpu_custom_call.1} parent=1 // pred_check_branch
      %38 = sbr.rel (0) target = $region17
    $region16: #{tpu_custom_call.1} parent=1 // pred_region
      %39 = dma.done [#allocation3], 2048
    $region17: #{tpu_custom_call.1} parent=1 // pred_fallthru
      _
    // Predicated region
    $region18: #{tpu_custom_call.1} parent=1 // pred_check
      _
    $region19: #{tpu_custom_call.1} parent=1 // pred_check_branch
      %41 = sbr.rel (0) target = $region21
    $region20: #{tpu_custom_call.1} parent=1 // pred_region
      %42 = dma.done [#allocation6], 512
    $region21: #{tpu_custom_call.1} parent=1 // pred_fallthru
      _
    %v43 = vld [vmem:[#allocation2] sm:$0xff]
    %v44 = vld [vmem:[#allocation2 + $0x8] sm:$0xff]
    %v45 = vld [vmem:[#allocation2 + $0x10] sm:$0xff]
    %v46 = vld [vmem:[#allocation2 + $0x18] sm:$0xff]
    %v47 = vld [vmem:[#allocation2 + $0x20] sm:$0xff]
    %v48 = vld [vmem:[#allocation2 + $0x28] sm:$0xff]
    %v49 = vld [vmem:[#allocation2 + $0x30] sm:$0xff]
    %v50 = vld [vmem:[#allocation2 + $0x38] sm:$0xff]
    %v51 = vld [vmem:[#allocation2 + $0x40] sm:$0xff]
    %v52 = vld [vmem:[#allocation2 + $0x48] sm:$0xff]
    %v53 = vld [vmem:[#allocation2 + $0x50] sm:$0xff]
    %v54 = vld [vmem:[#allocation2 + $0x58] sm:$0xff]
    %v55 = vld [vmem:[#allocation2 + $0x60] sm:$0xff]
    %v56 = vld [vmem:[#allocation2 + $0x68] sm:$0xff]
    %v57 = vld [vmem:[#allocation2 + $0x70] sm:$0xff]
    %v58 = vld [vmem:[#allocation2 + $0x78] sm:$0xff]
    %v59 = vadd.f32 %v43, %v44
    %60 = vadd.xlane.f32.xlu0 %v59
    %v61 = vpop.xlane.xlu0 %60
    %v62 = vadd.f32 %v45, %v46
    %63 = vadd.xlane.f32.xlu0 %v62
    %v64 = vpop.xlane.xlu0 %63
    %v65 = vadd.f32 %v47, %v48
    %66 = vadd.xlane.f32.xlu0 %v65
    %v67 = vpop.xlane.xlu0 %66
    %v68 = vadd.f32 %v49, %v50
    %69 = vadd.xlane.f32.xlu0 %v68
    %v70 = vpop.xlane.xlu0 %69
    %v71 = vadd.f32 %v51, %v52
    %72 = vadd.xlane.f32.xlu0 %v71
    %v73 = vpop.xlane.xlu0 %72
    %v74 = vadd.f32 %v53, %v54
    %75 = vadd.xlane.f32.xlu0 %v74
    %v76 = vpop.xlane.xlu0 %75
    %v77 = vadd.f32 %v55, %v56
    %78 = vadd.xlane.f32.xlu0 %v77
    %v79 = vpop.xlane.xlu0 %78
    %v80 = vadd.f32 %v57, %v58
    %81 = vadd.xlane.f32.xlu0 %v80
    %v82 = vpop.xlane.xlu0 %81
    %v83 = vld [vmem:[#allocation5] sm:$0xff]
    %v84 = vld [vmem:[#allocation5 + $0x8] sm:$0xff]
    %v85 = vld [vmem:[#allocation5 + $0x10] sm:$0xff]
    %v86 = vld [vmem:[#allocation5 + $0x18] sm:$0xff]
    %v87 = vld [vmem:[%s2] sm:$0x1]
    %v89 = vlaneseq
    %v90 = vshrl.u32 %v89, 7
    %v91 = vsub.s32 0, %v90
    %v92 = vrot.slane %v87, %v91
    %v102 = vlaneseq
    %v103 = vand.u32 %v102, 127
    %v104 = vlaneseq
    %v105 = vshrl.u32 %v104, 7
    %v106 = vsub.s32 %v103, %v105
    %v107 = vrot.slane %v61, %v106
    %v108 = vadd.s32 %v103, 4294967288
    %v109 = vlaneseq
    %v110 = vshrl.u32 %v109, 7
    %v111 = vsub.s32 %v108, %v110
    %v112 = vrot.slane %v64, %v111
    %vm113 = vcmask 130112
    %v114 = vsel %vm113, %v112, %v107
    %v115 = vadd.s32 %v103, 4294967280
    %v116 = vlaneseq
    %v117 = vshrl.u32 %v116, 7
    %v118 = vsub.s32 %v115, %v117
    %v119 = vrot.slane %v67, %v118
    %vm120 = vcmask 195712
    %v121 = vsel %vm120, %v119, %v114
    %v122 = vadd.s32 %v103, 4294967272
    %v123 = vlaneseq
    %v124 = vshrl.u32 %v123, 7
    %v125 = vsub.s32 %v122, %v124
    %v126 = vrot.slane %v70, %v125
    %vm127 = vcmask 261312
    %v128 = vsel %vm127, %v126, %v121
    %v129 = vlaneseq
    %v130 = vshrl.u32 %v129, 7
    %v131 = vsub.s32 %v103, %v130
    %v132 = vrot.slane %v73, %v131
    %v133 = vlaneseq
    %v134 = vshrl.u32 %v133, 7
    %v135 = vsub.s32 %v108, %v134
    %v136 = vrot.slane %v76, %v135
    %v137 = vsel %vm113, %v136, %v132
    %v138 = vlaneseq
    %v139 = vshrl.u32 %v138, 7
    %v140 = vsub.s32 %v115, %v139
    %v141 = vrot.slane %v79, %v140
    %v142 = vsel %vm120, %v141, %v137
    %v143 = vlaneseq
    %v144 = vshrl.u32 %v143, 7
    %v145 = vsub.s32 %v122, %v144
    %v146 = vrot.slane %v82, %v145
    %v147 = vsel %vm127, %v146, %v142
    %vm148 = vcmask 1041409
    %v149 = vsel %vm148, %v147, %v128
    %vm150 = vcmask 261120
    %v151 = vsel %vm150, %v149, 0
    %153 = vmatprep.subr.mxu0 0.0
    %154 = vmatpush1.msra.mxu0 0.0
    %155 = vmatprep.subr.mxu0 0.0
    %156 = vmatpush1.msra.mxu0 0.0
    %157 = vmatprep.subr.mxu0 0.0
    %158 = vmatpush1.msra.mxu0 0.0
    %159 = vmatprep.subr.mxu0 0.0
    %160 = vmatpush1.msra.mxu0 0.0
    %161 = vmatprep.subr.mxu0 0.0
    %162 = vmatpush1.msra.mxu0 0.0
    %163 = vmatprep.subr.mxu0 0.0
    %164 = vmatpush1.msra.mxu0 0.0
    %165 = vmatprep.subr.mxu0 0.0
    %166 = vmatpush1.msra.mxu0 0.0
    %167 = vmatprep.subr.mxu0 0.0
    %168 = vmatpush1.msra.mxu0 0.0
    %169 = vmatprep.subr.mxu0 0.0
    %170 = vmatpush1.msra.mxu0 0.0
    %171 = vmatprep.subr.mxu0 0.0
    %172 = vmatpush1.msra.mxu0 0.0
    %173 = vmatprep.subr.mxu0 0.0
    %174 = vmatpush1.msra.mxu0 0.0
    %175 = vmatprep.subr.mxu0 0.0
    %176 = vmatpush1.msra.mxu0 0.0
    %177 = vmatprep.subr.mxu0 0.0
    %178 = vmatpush1.msra.mxu0 %v86
    %179 = vmatprep.subr.mxu0 0.0
    %180 = vmatpush1.msra.mxu0 %v85
    %181 = vmatprep.subr.mxu0 0.0
    %182 = vmatpush1.msra.mxu0 %v84
    %183 = vmatprep.subr.mxu0 0.0
    %184 = vmatpush1.msra.mxu0 %v83
    %185 = vmatprep.subr.mxu0 0.0
    %186 = vmatpush2.msra.mxu0 0.0
    %187 = vmatprep.subr.mxu0 0.0
    %188 = vmatpush2.msra.mxu0 0.0
    %189 = vmatprep.subr.mxu0 0.0
    %190 = vmatpush2.msra.mxu0 0.0
    %191 = vmatprep.subr.mxu0 0.0
    %192 = vmatpush2.msra.mxu0 0.0
    %193 = vmatprep.subr.mxu0 0.0
    %194 = vmatpush2.msra.mxu0 0.0
    %195 = vmatprep.subr.mxu0 0.0
    %196 = vmatpush2.msra.mxu0 0.0
    %197 = vmatprep.subr.mxu0 0.0
    %198 = vmatpush2.msra.mxu0 0.0
    %199 = vmatprep.subr.mxu0 0.0
    %200 = vmatpush2.msra.mxu0 0.0
    %201 = vmatprep.subr.mxu0 0.0
    %202 = vmatpush2.msra.mxu0 0.0
    %203 = vmatprep.subr.mxu0 0.0
    %204 = vmatpush2.msra.mxu0 0.0
    %205 = vmatprep.subr.mxu0 0.0
    %206 = vmatpush2.msra.mxu0 0.0
    %207 = vmatprep.subr.mxu0 0.0
    %208 = vmatpush2.msra.mxu0 0.0
    %209 = vmatprep.subr.mxu0 0.0
    %210 = vmatpush2.msra.mxu0 0.0
    %211 = vmatprep.subr.mxu0 0.0
    %212 = vmatpush2.msra.mxu0 0.0
    %213 = vmatprep.subr.mxu0 0.0
    %214 = vmatpush2.msra.mxu0 0.0
    %215 = vmatprep.subr.mxu0 0.0
    %216 = vmatpush2.msra.mxu0 0.0
    %217 = vmatprep.mubr.f32.mxu0 0.0
    %218 = vmatmul.mubr.f32.gmra.mxu0 %v151
    %v219 = vpop.f32.mrf.mxu0
    %v220 = vadd.f32 %v92, %v219
    %v221 = vpop.f32.mrf.mxu0
    %222 = vdwg.mxu0
    %223 = vst [vmem:[#allocation7] sm:$0x3] %v220
    // Predicated region
    $region22: #{tpu_custom_call.1} parent=1 // pred_check
      _
    $region23: #{tpu_custom_call.1} parent=1 // pred_check_branch
      %225 = sbr.rel (0) target = $region25
    $region24: #{tpu_custom_call.1} parent=1 // pred_region
      %s227 = ssub.s32 32, 32
      %228 = vsyncadd [#allocation4], %s227
      %s230 = sshll.u32 [#allocation7], 4
      %s231 = int_to_ptr.vmem [resolvable:$true] %s230
      %233 = dma.vmem_to_hbm [thread:$0]  %s231, 32, %s3, [#allocation4]
    $region25: #{tpu_custom_call.1} parent=1 // pred_fallthru
      _
    // Predicated region
    $region26: #{tpu_custom_call.1} parent=1 // pred_check
      _
    $region27: #{tpu_custom_call.1} parent=1 // pred_check_branch
      %235 = sbr.rel (0) target = $region29
    $region28: #{tpu_custom_call.1} parent=1 // pred_region
      %236 = dma.done [#allocation4], 32
    $region29: #{tpu_custom_call.1} parent=1 // pred_fallthru
      _
    %237 = vsyncpa [#allocation3], 1
    %238 = vsyncpa [#allocation6], 1
    %239 = vsyncpa [#allocation4], 1

</llo_original>
